<compile_context>
chip_gen: v7x
topology: tpu7x:2x2x1
jax: 0.10.0
libtpu: 0.0.40
codegen_flags: <defaults>
</compile_context>

<pallas_src>
import numpy as np
import jax
import jax.numpy as jnp
from jax.experimental import pallas as pl
from jax.experimental.pallas import tpu as pltpu

EPS = 1e-5                        # nn.BatchNorm2d default eps
_VMEM_LIMIT = 32 * 1024 * 1024    # explicit scoped-VMEM limit (safe on v5e/v6e/v7x)
_VMEM_BUDGET = 24 * 1024 * 1024   # budget for the double-buffered data tiles


# --------------------------------------------------------------------------- #
# Kernel 1: gamma/beta MLPs (runs once; hoisted out of the per-tile loop).     #
# --------------------------------------------------------------------------- #
def gamma_beta_kernel(text_ref, w1_ref, b1_ref,
                      w2g_ref, b2g_ref, w2b_ref, b2b_ref,
                      gamma_ref, beta_ref):
    # text: (B, 256); w1: (256, 512) = [w1_gamma | w1_beta] fused first layers.
    h = jnp.maximum(
        jnp.dot(text_ref[...], w1_ref[...],
                preferred_element_type=jnp.float32) + b1_ref[...],
        0.0)                                                    # (B, 512)
    hg = h[:, :256]
    hb = h[:, 256:]
    gamma_ref[...] = jnp.dot(hg, w2g_ref[...],
                             preferred_element_type=jnp.float32) + b2g_ref[...]
    beta_ref[...] = jnp.dot(hb, w2b_ref[...],
                            preferred_element_type=jnp.float32) + b2b_ref[...]


# --------------------------------------------------------------------------- #
# Kernel 2: fused BatchNorm (training stats, affine=False) + modulation.       #
# One grid step = one channel tile; tiles are independent ("parallel").        #
# --------------------------------------------------------------------------- #
def bn_modulate_kernel(x_ref, mask_ref, gamma_ref, beta_ref, out_ref):
    x = x_ref[...]                                              # (B, C_blk, HW)
    n = x.shape[0] * x.shape[2]                                 # static B * HW
    inv_n = 1.0 / float(n)

    # One-pass batch statistics: E[x], E[x^2] (biased variance, like PyTorch BN).
    s1 = jnp.sum(x, axis=(0, 2), keepdims=True)                 # (1, C_blk, 1)
    s2 = jnp.sum(x * x, axis=(0, 2), keepdims=True)             # (1, C_blk, 1)
    mean = s1 * inv_n
    var = s2 * inv_n - mean * mean
    inv_std = jax.lax.rsqrt(var + EPS)                          # EUP rsqrt
    bn = (x - mean) * inv_std                                   # (B, C_blk, HW)

    gamma = gamma_ref[...]                                      # (B, C_blk, 1): lane bcast
    beta = beta_ref[...]                                        # (B, C_blk, 1)
    mask = mask_ref[...]                                        # (B, 1, HW): sublane bcast
    out_ref[...] = mask * (gamma * bn + beta) + bn


# --------------------------------------------------------------------------- #
# Wrappers                                                                     #
# --------------------------------------------------------------------------- #
def _full_spec(shape):
    zero = (0,) * len(shape)
    return pl.BlockSpec(tuple(shape), lambda i, _z=zero: _z)


def _choose_c_block(B, C, HW, itemsize=4, budget_bytes=_VMEM_BUDGET):
    """Channel tile: a multiple of 8 dividing C whose double-buffered x+out
    tiles fit the VMEM budget; prefers >= 2 tiles so both v7x cores get work."""
    if C % 8 != 0:
        return C  # tiny / awkward C: single full-C tile (last dims = full array dims)
    per_channel = B * HW * itemsize * 2 * 2      # (x tile + out tile) * double-buffer
    candidates = [c for c in range(C, 7, -8) if C % c == 0]          # largest first
    fitting = [c for c in candidates if c * per_channel <= budget_bytes]
    if not fitting:
        # For extreme B*HW a two-pass (stats, then apply) scheme with HW tiling
        # would be required; fall back to the smallest legal channel tile.
        fitting = [candidates[-1]]
    multi = [c for c in fitting if C // c >= 2]
    return multi[0] if multi else fitting[0]


def _gamma_beta(text_features, params, B, C):
    (w1g, b1g, w2g, b2g, w1b, b1b, w2b, b2b) = params
    w1 = jnp.concatenate([w1g, w1b], axis=1)        # (256, 512)
    b1 = jnp.concatenate([b1g, b1b], axis=1)        # (1, 512)
    gamma, beta = pl.pallas_call(
        gamma_beta_kernel,
        out_shape=(jax.ShapeDtypeStruct((B, C), jnp.float32),
                   jax.ShapeDtypeStruct((B, C), jnp.float32)),
        grid=(1,),
        in_specs=[
            _full_spec(text_features.shape),
            _full_spec(w1.shape), _full_spec(b1.shape),
            _full_spec(w2g.shape), _full_spec(b2g.shape),
            _full_spec(w2b.shape), _full_spec(b2b.shape),
        ],
        out_specs=(_full_spec((B, C)), _full_spec((B, C))),
        compiler_params=pltpu.CompilerParams(
            dimension_semantics=("arbitrary",),
            vmem_limit_bytes=_VMEM_LIMIT),
    )(text_features, w1, b1, w2g, b2g, w2b, b2b)
    return gamma, beta


def sscbn_forward(x_nchw, text_features, mask_nchw, params):
    """x_nchw: (B,C,H,W) f32, text_features: (B,256) f32, mask_nchw: (B,1,H,W) f32."""
    B, C, H, W = x_nchw.shape
    HW = H * W
    x = x_nchw.reshape(B, C, HW)
    mask = mask_nchw.reshape(B, 1, HW)

    # Tiny text-conditioning MLPs: computed once, not per channel tile.
    gamma, beta = _gamma_beta(text_features, params, B, C)
    gamma3 = gamma.reshape(B, C, 1)
    beta3 = beta.reshape(B, C, 1)

    c_blk = _choose_c_block(B, C, HW)
    grid = (C // c_blk,)

    out = pl.pallas_call(
        bn_modulate_kernel,
        out_shape=jax.ShapeDtypeStruct((B, C, HW), jnp.float32),
        grid=grid,
        in_specs=[
            pl.BlockSpec((B, c_blk, HW), lambda i: (0, i, 0)),   # x channel tile
            pl.BlockSpec((B, 1, HW), lambda i: (0, 0, 0)),       # mask (resident, fetched once)
            pl.BlockSpec((B, c_blk, 1), lambda i: (0, i, 0)),    # gamma tile
            pl.BlockSpec((B, c_blk, 1), lambda i: (0, i, 0)),    # beta tile
        ],
        out_specs=pl.BlockSpec((B, c_blk, HW), lambda i: (0, i, 0)),
        compiler_params=pltpu.CompilerParams(
            dimension_semantics=("parallel",),
            vmem_limit_bytes=_VMEM_LIMIT),
    )(x, mask, gamma3, beta3)

    return out.reshape(B, C, H, W)


# --------------------------------------------------------------------------- #
# Pure-JAX reference mirroring the PyTorch forward                             #
# --------------------------------------------------------------------------- #
def sscbn_reference(x_nchw, text_features, mask_nchw, params):
    (w1g, b1g, w2g, b2g, w1b, b1b, w2b, b2b) = params
    mean = jnp.mean(x_nchw, axis=(0, 2, 3), keepdims=True)
    var = jnp.mean((x_nchw - mean) ** 2, axis=(0, 2, 3), keepdims=True)
    bn = (x_nchw - mean) / jnp.sqrt(var + EPS)
    hg = jnp.maximum(text_features @ w1g + b1g, 0.0)
    gamma = hg @ w2g + b2g                       # (B, C)
    hb = jnp.maximum(text_features @ w1b + b1b, 0.0)
    beta = hb @ w2b + b2b                        # (B, C)
    gamma = gamma[:, :, None, None]
    beta = beta[:, :, None, None]
    return mask_nchw * (gamma * bn + beta) + bn


def _make_inputs(key, B, C, H, W):
    TXT = 256                      # text feature dim fixed by the module
    keys = jax.random.split(key, 11)
    x = jax.random.normal(keys[0], (B, C, H, W), dtype=jnp.float32)
    text = jax.random.normal(keys[1], (B, TXT), dtype=jnp.float32)
    mask = jax.nn.sigmoid(jax.random.normal(keys[2], (B, 1, H, W), dtype=jnp.float32))
    scale = 0.05
    # Linear weights stored pre-transposed as (in_features, out_features); y = x @ W + b.
    w1g = scale * jax.random.normal(keys[3], (TXT, TXT), dtype=jnp.float32)
    b1g = scale * jax.random.normal(keys[4], (1, TXT), dtype=jnp.float32)
    w2g = scale * jax.random.normal(keys[5], (TXT, C), dtype=jnp.float32)
    b2g = scale * jax.random.normal(keys[6], (1, C), dtype=jnp.float32)
    w1b = scale * jax.random.normal(keys[7], (TXT, TXT), dtype=jnp.float32)
    b1b = scale * jax.random.normal(keys[8], (1, TXT), dtype=jnp.float32)
    w2b = scale * jax.random.normal(keys[9], (TXT, C), dtype=jnp.float32)
    b2b = scale * jax.random.normal(keys[10], (1, C), dtype=jnp.float32)
    params = (w1g, b1g, w2g, b2g, w1b, b1b, w2b, b2b)
    return x, text, mask, params


if __name__ == "__main__":
    key = jax.random.PRNGKey(0)
    k1, k2 = jax.random.split(key)

    # Config A: channel-tiled path (C=16 -> c_blk=8, grid=(2,), dense sublanes).
    # Config B: small-C fallback (C=4 -> single full-C tile), the original toy shape.
    for cfg_key, (B, C, H, W) in ((k1, (2, 16, 16, 16)), (k2, (2, 4, 16, 16))):
        x, text, mask, params = _make_inputs(cfg_key, B, C, H, W)
        out = jax.block_until_ready(sscbn_forward(x, text, mask, params))
        ref = jax.block_until_ready(sscbn_reference(x, text, mask, params))
        assert out.shape == (B, C, H, W)
        np.testing.assert_allclose(np.asarray(out), np.asarray(ref),
                                   rtol=1e-4, atol=1e-4)

    print("KERNEL_OK")
</pallas_src>

<mosaic_0001>
module attributes {stable_mosaic.version = 11 : i64} {
  func.func @gamma_beta_kernel(%arg0: i32, %arg1: memref<2x256xf32, #tpu.memory_space<vmem>>, %arg2: memref<256x512xf32, #tpu.memory_space<vmem>>, %arg3: memref<1x512xf32, #tpu.memory_space<vmem>>, %arg4: memref<256x16xf32, #tpu.memory_space<vmem>>, %arg5: memref<1x16xf32, #tpu.memory_space<vmem>>, %arg6: memref<256x16xf32, #tpu.memory_space<vmem>>, %arg7: memref<1x16xf32, #tpu.memory_space<vmem>>, %arg8: memref<2x16xf32, #tpu.memory_space<vmem>>, %arg9: memref<2x16xf32, #tpu.memory_space<vmem>>) attributes {dimension_semantics = [#tpu.dimension_semantics<arbitrary>], iteration_bounds = array<i64: 1>, scalar_prefetch = 0 : i64, scratch_operands = 0 : i64, tpu.core_type = #tpu.core_type<tc>, window_params = [{pipeline_mode = #tpu.pipeline_mode<synchronous>, transform_indices = @transform_0, window_bounds = array<i64: 2, 256>}, {pipeline_mode = #tpu.pipeline_mode<synchronous>, transform_indices = @transform_1, window_bounds = array<i64: 256, 512>}, {pipeline_mode = #tpu.pipeline_mode<synchronous>, transform_indices = @transform_2, window_bounds = array<i64: 1, 512>}, {pipeline_mode = #tpu.pipeline_mode<synchronous>, transform_indices = @transform_3, window_bounds = array<i64: 256, 16>}, {pipeline_mode = #tpu.pipeline_mode<synchronous>, transform_indices = @transform_4, window_bounds = array<i64: 1, 16>}, {pipeline_mode = #tpu.pipeline_mode<synchronous>, transform_indices = @transform_5, window_bounds = array<i64: 256, 16>}, {pipeline_mode = #tpu.pipeline_mode<synchronous>, transform_indices = @transform_6, window_bounds = array<i64: 1, 16>}, {pipeline_mode = #tpu.pipeline_mode<synchronous>, transform_indices = @transform_7, window_bounds = array<i64: 2, 16>}, {pipeline_mode = #tpu.pipeline_mode<synchronous>, transform_indices = @transform_8, window_bounds = array<i64: 2, 16>}]} {
    %c0 = arith.constant 0 : index
    %c0_0 = arith.constant 0 : index
    %0 = vector.load %arg1[%c0, %c0_0] : memref<2x256xf32, #tpu.memory_space<vmem>>, vector<2x256xf32>
    %c0_1 = arith.constant 0 : index
    %c0_2 = arith.constant 0 : index
    %1 = vector.load %arg2[%c0_1, %c0_2] : memref<256x512xf32, #tpu.memory_space<vmem>>, vector<256x512xf32>
    %cst = arith.constant dense<0.000000e+00> : vector<2x512xf32>
    %2 = tpu.matmul %0, %1, %cst {dimension_numbers = #tpu.dot_dimension_numbers<[1], [0], [0], [1], [0, 0, 1, 1], [], []>} : vector<2x256xf32>, vector<256x512xf32>, vector<2x512xf32> -> vector<2x512xf32>
    %c0_3 = arith.constant 0 : index
    %c0_4 = arith.constant 0 : index
    %3 = vector.load %arg3[%c0_3, %c0_4] : memref<1x512xf32, #tpu.memory_space<vmem>>, vector<1x512xf32>
    %4 = vector.broadcast %3 : vector<1x512xf32> to vector<2x512xf32>
    %5 = arith.addf %2, %4 : vector<2x512xf32>
    %cst_5 = arith.constant 0.000000e+00 : f32
    %6 = vector.broadcast %cst_5 : f32 to vector<2x512xf32>
    %7 = arith.maximumf %5, %6 : vector<2x512xf32>
    %8 = vector.extract_strided_slice %7 {offsets = [0, 0], sizes = [2, 256], strides = [1, 1]} : vector<2x512xf32> to vector<2x256xf32>
    %9 = vector.extract_strided_slice %7 {offsets = [0, 256], sizes = [2, 256], strides = [1, 1]} : vector<2x512xf32> to vector<2x256xf32>
    %c0_6 = arith.constant 0 : index
    %c0_7 = arith.constant 0 : index
    %10 = vector.load %arg4[%c0_6, %c0_7] : memref<256x16xf32, #tpu.memory_space<vmem>>, vector<256x16xf32>
    %cst_8 = arith.constant dense<0.000000e+00> : vector<2x16xf32>
    %11 = tpu.matmul %8, %10, %cst_8 {dimension_numbers = #tpu.dot_dimension_numbers<[1], [0], [0], [1], [0, 0, 1, 1], [], []>} : vector<2x256xf32>, vector<256x16xf32>, vector<2x16xf32> -> vector<2x16xf32>
    %c0_9 = arith.constant 0 : index
    %c0_10 = arith.constant 0 : index
    %12 = vector.load %arg5[%c0_9, %c0_10] : memref<1x16xf32, #tpu.memory_space<vmem>>, vector<1x16xf32>
    %13 = vector.broadcast %12 : vector<1x16xf32> to vector<2x16xf32>
    %14 = arith.addf %11, %13 : vector<2x16xf32>
    %c0_11 = arith.constant 0 : index
    %c0_12 = arith.constant 0 : index
    %15 = vector.load %arg8[%c0_11, %c0_12] : memref<2x16xf32, #tpu.memory_space<vmem>>, vector<2x16xf32>
    tpu.vector_store %arg8[%c0_11, %c0_12], %14 {strides = array<i32>} : memref<2x16xf32, #tpu.memory_space<vmem>>, vector<2x16xf32>,
    %c0_13 = arith.constant 0 : index
    %c0_14 = arith.constant 0 : index
    %16 = vector.load %arg6[%c0_13, %c0_14] : memref<256x16xf32, #tpu.memory_space<vmem>>, vector<256x16xf32>
    %cst_15 = arith.constant dense<0.000000e+00> : vector<2x16xf32>
    %17 = tpu.matmul %9, %16, %cst_15 {dimension_numbers = #tpu.dot_dimension_numbers<[1], [0], [0], [1], [0, 0, 1, 1], [], []>} : vector<2x256xf32>, vector<256x16xf32>, vector<2x16xf32> -> vector<2x16xf32>
    %c0_16 = arith.constant 0 : index
    %c0_17 = arith.constant 0 : index
    %18 = vector.load %arg7[%c0_16, %c0_17] : memref<1x16xf32, #tpu.memory_space<vmem>>, vector<1x16xf32>
    %19 = vector.broadcast %18 : vector<1x16xf32> to vector<2x16xf32>
    %20 = arith.addf %17, %19 : vector<2x16xf32>
    %c0_18 = arith.constant 0 : index
    %c0_19 = arith.constant 0 : index
    %21 = vector.load %arg9[%c0_18, %c0_19] : memref<2x16xf32, #tpu.memory_space<vmem>>, vector<2x16xf32>
    tpu.vector_store %arg9[%c0_18, %c0_19], %20 {strides = array<i32>} : memref<2x16xf32, #tpu.memory_space<vmem>>, vector<2x16xf32>,
    return
  }
  func.func @transform_0(%arg0: i32) -> (i32, i32) {
    %c0_i32 = arith.constant 0 : i32
    %c0_i32_0 = arith.constant 0 : i32
    %c0_i32_1 = arith.constant 0 : i32
    return %c0_i32, %c0_i32_0 : i32, i32
  }
  func.func @transform_1(%arg0: i32) -> (i32, i32) {
    %c0_i32 = arith.constant 0 : i32
    %c0_i32_0 = arith.constant 0 : i32
    %c0_i32_1 = arith.constant 0 : i32
    return %c0_i32, %c0_i32_0 : i32, i32
  }
  func.func @transform_2(%arg0: i32) -> (i32, i32) {
    %c0_i32 = arith.constant 0 : i32
    %c0_i32_0 = arith.constant 0 : i32
    %c0_i32_1 = arith.constant 0 : i32
    return %c0_i32, %c0_i32_0 : i32, i32
  }
  func.func @transform_3(%arg0: i32) -> (i32, i32) {
    %c0_i32 = arith.constant 0 : i32
    %c0_i32_0 = arith.constant 0 : i32
    %c0_i32_1 = arith.constant 0 : i32
    return %c0_i32, %c0_i32_0 : i32, i32
  }
  func.func @transform_4(%arg0: i32) -> (i32, i32) {
    %c0_i32 = arith.constant 0 : i32
    %c0_i32_0 = arith.constant 0 : i32
    %c0_i32_1 = arith.constant 0 : i32
    return %c0_i32, %c0_i32_0 : i32, i32
  }
  func.func @transform_5(%arg0: i32) -> (i32, i32) {
    %c0_i32 = arith.constant 0 : i32
    %c0_i32_0 = arith.constant 0 : i32
    %c0_i32_1 = arith.constant 0 : i32
    return %c0_i32, %c0_i32_0 : i32, i32
  }
  func.func @transform_6(%arg0: i32) -> (i32, i32) {
    %c0_i32 = arith.constant 0 : i32
    %c0_i32_0 = arith.constant 0 : i32
    %c0_i32_1 = arith.constant 0 : i32
    return %c0_i32, %c0_i32_0 : i32, i32
  }
  func.func @transform_7(%arg0: i32) -> (i32, i32) {
    %c0_i32 = arith.constant 0 : i32
    %c0_i32_0 = arith.constant 0 : i32
    %c0_i32_1 = arith.constant 0 : i32
    return %c0_i32, %c0_i32_0 : i32, i32
  }
  func.func @transform_8(%arg0: i32) -> (i32, i32) {
    %c0_i32 = arith.constant 0 : i32
    %c0_i32_0 = arith.constant 0 : i32
    %c0_i32_1 = arith.constant 0 : i32
    return %c0_i32, %c0_i32_0 : i32, i32
  }
}

</mosaic_0001>

<llo_original>
// kernel: tpu_custom_call.1
$region0: #{tpu_custom_call.1}
  #allocation0 [shape = 'u32[]', space=smem, size = 0x4, offset = 0x4, fixed_abs, tag = 'smem constant byte address 0x4 - core index']
  #allocation1 [shape = 'u32[144,128]{1,0:T(1,128)}', space=vmem, size = 0x12000, scoped, tag = 'internal scratch']
  %s0 = inlined_call_operand.vmem [shape: f32[2,256], index: 0, kind: input, shape index: {}]
  %s1 = inlined_call_operand.hbm [shape: f32[256,512], index: 1, kind: input, shape index: {}]
  %s2 = inlined_call_operand.vmem [shape: f32[1,512], index: 2, kind: input, shape index: {}]
  %s3 = inlined_call_operand.vmem [shape: f32[256,16], index: 3, kind: input, shape index: {}]
  %s4 = inlined_call_operand.vmem [shape: f32[1,16], index: 4, kind: input, shape index: {}]
  %s5 = inlined_call_operand.vmem [shape: f32[256,16], index: 5, kind: input, shape index: {}]
  %s6 = inlined_call_operand.vmem [shape: f32[1,16], index: 6, kind: input, shape index: {}]
  %s7 = inlined_call_operand.hbm [shape: f32[2,16], index: 7, kind: output, shape index: {0}]
  %s8 = inlined_call_operand.hbm [shape: f32[2,16], index: 8, kind: output, shape index: {1}]
  %9 = xla_tuple %s7, %s8
  %s10 = sld [smem:[#allocation0]]
  $region50: #{tpu_custom_call.1} parent=0
    _
  %s12 = ssub.s32 1, %s10
  %s13 = scalar_select 0, %s12, %s10
  $region1: #{tpu_custom_call.1} parent=0
    #allocation2 [shape = 'u8[524288]{0}', space=vmem, size = 0x80000, scoped, tag = 'input window, operand 1, single buffered']
    #allocation3 [shape = 's32[1]{0}', space=sflag, size = 0x4, scoped, tag = 'scoped memory for tpu_custom_call.1']
    #allocation4 [shape = 's32[1]{0}', space=sflag, size = 0x4, scoped, tag = 'scoped memory for tpu_custom_call.1']
    #allocation5 [shape = 'u8[1024]{0}', space=vmem, size = 0x400, scoped, tag = 'output window, operand 0, single buffered']
    #allocation6 [shape = 'u8[1024]{0}', space=vmem, size = 0x400, scoped, tag = 'output window, operand 1, single buffered']
    #allocation7 [shape = 's32[1]{0}', space=sflag, size = 0x4, scoped, tag = 'scoped memory for tpu_custom_call.1']
    %14 = vsyncpa [#allocation3], 0
    %15 = vsyncpa [#allocation4], 0
    %16 = vsyncpa [#allocation7], 0
    // Predicated region
    $region2: #{tpu_custom_call.1} parent=1 // pred_check
      _
    $region3: #{tpu_custom_call.1} parent=1 // pred_check_branch
      %18 = sbr.rel (0) target = $region5
    $region4: #{tpu_custom_call.1} parent=1 // pred_region
      _
    $region5: #{tpu_custom_call.1} parent=1 // pred_fallthru
      _
    // Predicated region
    $region6: #{tpu_custom_call.1} parent=1 // pred_check
      _
    $region7: #{tpu_custom_call.1} parent=1 // pred_check_branch
      %20 = sbr.rel (0) target = $region9
    $region8: #{tpu_custom_call.1} parent=1 // pred_region
      %s22 = ssub.s32 16384, 16384
      %23 = vsyncadd [#allocation3], %s22
      %s24 = sshll.u32 [#allocation2], 4
      %s25 = int_to_ptr.vmem [resolvable:$true] %s24
      %30 = dma.hbm_to_vmem [thread:$0]  %s1, 16384, %s25, [#allocation3], 512, 512, 32
    $region9: #{tpu_custom_call.1} parent=1 // pred_fallthru
      _
    // Predicated region
    $region10: #{tpu_custom_call.1} parent=1 // pred_check
      _
    $region11: #{tpu_custom_call.1} parent=1 // pred_check_branch
      %32 = sbr.rel (0) target = $region13
    $region12: #{tpu_custom_call.1} parent=1 // pred_region
      _
    $region13: #{tpu_custom_call.1} parent=1 // pred_fallthru
      _
    // Predicated region
    $region14: #{tpu_custom_call.1} parent=1 // pred_check
      _
    $region15: #{tpu_custom_call.1} parent=1 // pred_check_branch
      %34 = sbr.rel (0) target = $region17
    $region16: #{tpu_custom_call.1} parent=1 // pred_region
      _
    $region17: #{tpu_custom_call.1} parent=1 // pred_fallthru
      _
    // Predicated region
    $region18: #{tpu_custom_call.1} parent=1 // pred_check
      _
    $region19: #{tpu_custom_call.1} parent=1 // pred_check_branch
      %36 = sbr.rel (0) target = $region21
    $region20: #{tpu_custom_call.1} parent=1 // pred_region
      _
    $region21: #{tpu_custom_call.1} parent=1 // pred_fallthru
      _
    // Predicated region
    $region22: #{tpu_custom_call.1} parent=1 // pred_check
      _
    $region23: #{tpu_custom_call.1} parent=1 // pred_check_branch
      %38 = sbr.rel (0) target = $region25
    $region24: #{tpu_custom_call.1} parent=1 // pred_region
      _
    $region25: #{tpu_custom_call.1} parent=1 // pred_fallthru
      _
    // Predicated region
    $region26: #{tpu_custom_call.1} parent=1 // pred_check
      _
    $region27: #{tpu_custom_call.1} parent=1 // pred_check_branch
      %40 = sbr.rel (0) target = $region29
    $region28: #{tpu_custom_call.1} parent=1 // pred_region
      _
    $region29: #{tpu_custom_call.1} parent=1 // pred_fallthru
      _
    // Predicated region
    $region30: #{tpu_custom_call.1} parent=1 // pred_check
      _
    $region31: #{tpu_custom_call.1} parent=1 // pred_check_branch
      %42 = sbr.rel (0) target = $region33
    $region32: #{tpu_custom_call.1} parent=1 // pred_region
      %43 = dma.done [#allocation3], 16384
    $region33: #{tpu_custom_call.1} parent=1 // pred_fallthru
      _
    %v44 = vld [vmem:[%s0] sm:$0xf]
    %v45 = vld [vmem:[#allocation2] sm:$0xff]
    %v46 = vld [vmem:[#allocation2 + $0x8] sm:$0xff]
    %v47 = vld [vmem:[#allocation2 + $0x10] sm:$0xff]
    %v48 = vld [vmem:[#allocation2 + $0x18] sm:$0xff]
    %v49 = vld [vmem:[#allocation2 + $0x20] sm:$0xff]
    %v50 = vld [vmem:[#allocation2 + $0x28] sm:$0xff]
    %v51 = vld [vmem:[#allocation2 + $0x30] sm:$0xff]
    %v52 = vld [vmem:[#allocation2 + $0x38] sm:$0xff]
    %v53 = vld [vmem:[#allocation2 + $0x40] sm:$0xff]
    %v54 = vld [vmem:[#allocation2 + $0x48] sm:$0xff]
    %v55 = vld [vmem:[#allocation2 + $0x50] sm:$0xff]
    %v56 = vld [vmem:[#allocation2 + $0x58] sm:$0xff]
    %v57 = vld [vmem:[#allocation2 + $0x60] sm:$0xff]
    %v58 = vld [vmem:[#allocation2 + $0x68] sm:$0xff]
    %v59 = vld [vmem:[#allocation2 + $0x70] sm:$0xff]
    %v60 = vld [vmem:[#allocation2 + $0x78] sm:$0xff]
    %v61 = vld [vmem:[#allocation2 + $0x80] sm:$0xff]
    %v62 = vld [vmem:[#allocation2 + $0x88] sm:$0xff]
    %v63 = vld [vmem:[#allocation2 + $0x90] sm:$0xff]
    %v64 = vld [vmem:[#allocation2 + $0x98] sm:$0xff]
    %v65 = vld [vmem:[#allocation2 + $0xa0] sm:$0xff]
    %v66 = vld [vmem:[#allocation2 + $0xa8] sm:$0xff]
    %v67 = vld [vmem:[#allocation2 + $0xb0] sm:$0xff]
    %v68 = vld [vmem:[#allocation2 + $0xb8] sm:$0xff]
    %v69 = vld [vmem:[#allocation2 + $0xc0] sm:$0xff]
    %v70 = vld [vmem:[#allocation2 + $0xc8] sm:$0xff]
    %v71 = vld [vmem:[#allocation2 + $0xd0] sm:$0xff]
    %v72 = vld [vmem:[#allocation2 + $0xd8] sm:$0xff]
    %v73 = vld [vmem:[#allocation2 + $0xe0] sm:$0xff]
    %v74 = vld [vmem:[#allocation2 + $0xe8] sm:$0xff]
    %v75 = vld [vmem:[#allocation2 + $0xf0] sm:$0xff]
    %v76 = vld [vmem:[#allocation2 + $0xf8] sm:$0xff]
    %v77 = vld [vmem:[#allocation2 + $0x100] sm:$0xff]
    %v78 = vld [vmem:[#allocation2 + $0x108] sm:$0xff]
    %v79 = vld [vmem:[#allocation2 + $0x110] sm:$0xff]
    %v80 = vld [vmem:[#allocation2 + $0x118] sm:$0xff]
    %v81 = vld [vmem:[#allocation2 + $0x120] sm:$0xff]
    %v82 = vld [vmem:[#allocation2 + $0x128] sm:$0xff]
    %v83 = vld [vmem:[#allocation2 + $0x130] sm:$0xff]
    %v84 = vld [vmem:[#allocation2 + $0x138] sm:$0xff]
    %v85 = vld [vmem:[#allocation2 + $0x140] sm:$0xff]
    %v86 = vld [vmem:[#allocation2 + $0x148] sm:$0xff]
    %v87 = vld [vmem:[#allocation2 + $0x150] sm:$0xff]
    %v88 = vld [vmem:[#allocation2 + $0x158] sm:$0xff]
    %v89 = vld [vmem:[#allocation2 + $0x160] sm:$0xff]
    %v90 = vld [vmem:[#allocation2 + $0x168] sm:$0xff]
    %v91 = vld [vmem:[#allocation2 + $0x170] sm:$0xff]
    %v92 = vld [vmem:[#allocation2 + $0x178] sm:$0xff]
    %v93 = vld [vmem:[#allocation2 + $0x180] sm:$0xff]
    %v94 = vld [vmem:[#allocation2 + $0x188] sm:$0xff]
    %v95 = vld [vmem:[#allocation2 + $0x190] sm:$0xff]
    %v96 = vld [vmem:[#allocation2 + $0x198] sm:$0xff]
    %v97 = vld [vmem:[#allocation2 + $0x1a0] sm:$0xff]
    %v98 = vld [vmem:[#allocation2 + $0x1a8] sm:$0xff]
    %v99 = vld [vmem:[#allocation2 + $0x1b0] sm:$0xff]
    %v100 = vld [vmem:[#allocation2 + $0x1b8] sm:$0xff]
    %v101 = vld [vmem:[#allocation2 + $0x1c0] sm:$0xff]
    %v102 = vld [vmem:[#allocation2 + $0x1c8] sm:$0xff]
    %v103 = vld [vmem:[#allocation2 + $0x1d0] sm:$0xff]
    %v104 = vld [vmem:[#allocation2 + $0x1d8] sm:$0xff]
    %v105 = vld [vmem:[#allocation2 + $0x1e0] sm:$0xff]
    %v106 = vld [vmem:[#allocation2 + $0x1e8] sm:$0xff]
    %v107 = vld [vmem:[#allocation2 + $0x1f0] sm:$0xff]
    %v108 = vld [vmem:[#allocation2 + $0x1f8] sm:$0xff]
    %v109 = vld [vmem:[#allocation2 + $0x200] sm:$0xff]
    %v110 = vld [vmem:[#allocation2 + $0x208] sm:$0xff]
    %v111 = vld [vmem:[#allocation2 + $0x210] sm:$0xff]
    %v112 = vld [vmem:[#allocation2 + $0x218] sm:$0xff]
    %v113 = vld [vmem:[#allocation2 + $0x220] sm:$0xff]
    %v114 = vld [vmem:[#allocation2 + $0x228] sm:$0xff]
    %v115 = vld [vmem:[#allocation2 + $0x230] sm:$0xff]
    %v116 = vld [vmem:[#allocation2 + $0x238] sm:$0xff]
    %v117 = vld [vmem:[#allocation2 + $0x240] sm:$0xff]
    %v118 = vld [vmem:[#allocation2 + $0x248] sm:$0xff]
    %v119 = vld [vmem:[#allocation2 + $0x250] sm:$0xff]
    %v120 = vld [vmem:[#allocation2 + $0x258] sm:$0xff]
    %v121 = vld [vmem:[#allocation2 + $0x260] sm:$0xff]
    %v122 = vld [vmem:[#allocation2 + $0x268] sm:$0xff]
    %v123 = vld [vmem:[#allocation2 + $0x270] sm:$0xff]
    %v124 = vld [vmem:[#allocation2 + $0x278] sm:$0xff]
    %v125 = vld [vmem:[#allocation2 + $0x280] sm:$0xff]
    %v126 = vld [vmem:[#allocation2 + $0x288] sm:$0xff]
    %v127 = vld [vmem:[#allocation2 + $0x290] sm:$0xff]
    %v128 = vld [vmem:[#allocation2 + $0x298] sm:$0xff]
    %v129 = vld [vmem:[#allocation2 + $0x2a0] sm:$0xff]
    %v130 = vld [vmem:[#allocation2 + $0x2a8] sm:$0xff]
    %v131 = vld [vmem:[#allocation2 + $0x2b0] sm:$0xff]
    %v132 = vld [vmem:[#allocation2 + $0x2b8] sm:$0xff]
    %v133 = vld [vmem:[#allocation2 + $0x2c0] sm:$0xff]
    %v134 = vld [vmem:[#allocation2 + $0x2c8] sm:$0xff]
    %v135 = vld [vmem:[#allocation2 + $0x2d0] sm:$0xff]
    %v136 = vld [vmem:[#allocation2 + $0x2d8] sm:$0xff]
    %v137 = vld [vmem:[#allocation2 + $0x2e0] sm:$0xff]
    %v138 = vld [vmem:[#allocation2 + $0x2e8] sm:$0xff]
    %v139 = vld [vmem:[#allocation2 + $0x2f0] sm:$0xff]
    %v140 = vld [vmem:[#allocation2 + $0x2f8] sm:$0xff]
    %v141 = vld [vmem:[#allocation2 + $0x300] sm:$0xff]
    %v142 = vld [vmem:[#allocation2 + $0x308] sm:$0xff]
    %v143 = vld [vmem:[#allocation2 + $0x310] sm:$0xff]
    %v144 = vld [vmem:[#allocation2 + $0x318] sm:$0xff]
    %v145 = vld [vmem:[#allocation2 + $0x320] sm:$0xff]
    %v146 = vld [vmem:[#allocation2 + $0x328] sm:$0xff]
    %v147 = vld [vmem:[#allocation2 + $0x330] sm:$0xff]
    %v148 = vld [vmem:[#allocation2 + $0x338] sm:$0xff]
    %v149 = vld [vmem:[#allocation2 + $0x340] sm:$0xff]
    %v150 = vld [vmem:[#allocation2 + $0x348] sm:$0xff]
    %v151 = vld [vmem:[#allocation2 + $0x350] sm:$0xff]
    %v152 = vld [vmem:[#allocation2 + $0x358] sm:$0xff]
    %v153 = vld [vmem:[#allocation2 + $0x360] sm:$0xff]
    %v154 = vld [vmem:[#allocation2 + $0x368] sm:$0xff]
    %v155 = vld [vmem:[#allocation2 + $0x370] sm:$0xff]
    %v156 = vld [vmem:[#allocation2 + $0x378] sm:$0xff]
    %v157 = vld [vmem:[#allocation2 + $0x380] sm:$0xff]
    %v158 = vld [vmem:[#allocation2 + $0x388] sm:$0xff]
    %v159 = vld [vmem:[#allocation2 + $0x390] sm:$0xff]
    %v160 = vld [vmem:[#allocation2 + $0x398] sm:$0xff]
    %v161 = vld [vmem:[#allocation2 + $0x3a0] sm:$0xff]
    %v162 = vld [vmem:[#allocation2 + $0x3a8] sm:$0xff]
    %v163 = vld [vmem:[#allocation2 + $0x3b0] sm:$0xff]
    %v164 = vld [vmem:[#allocation2 + $0x3b8] sm:$0xff]
    %v165 = vld [vmem:[#allocation2 + $0x3c0] sm:$0xff]
    %v166 = vld [vmem:[#allocation2 + $0x3c8] sm:$0xff]
    %v167 = vld [vmem:[#allocation2 + $0x3d0] sm:$0xff]
    %v168 = vld [vmem:[#allocation2 + $0x3d8] sm:$0xff]
    %v169 = vld [vmem:[#allocation2 + $0x3e0] sm:$0xff]
    %v170 = vld [vmem:[#allocation2 + $0x3e8] sm:$0xff]
    %v171 = vld [vmem:[#allocation2 + $0x3f0] sm:$0xff]
    %v172 = vld [vmem:[#allocation2 + $0x3f8] sm:$0xff]
    %v173 = vld [vmem:[%s2] sm:$0xf]
    %v175 = vlaneseq
    %v176 = vshrl.u32 %v175, 7
    %v177 = vsub.s32 0, %v176
    %v178 = vrot.slane %v173, %v177
    %v179 = vlaneseq
    %v180 = vshrl.u32 %v179, 7
    %v181 = vsub.s32 1, %v180
    %v182 = vrot.slane %v173, %v181
    %v183 = vlaneseq
    %v184 = vshrl.u32 %v183, 7
    %v185 = vsub.s32 2, %v184
    %v186 = vrot.slane %v173, %v185
    %v187 = vlaneseq
    %v188 = vshrl.u32 %v187, 7
    %v189 = vsub.s32 3, %v188
    %v190 = vrot.slane %v173, %v189
    %v197 = vunpack.c.l.s4 1983009808
    %v198 = vunpack.c.0.s8 %v197
    %v199 = vlaneseq
    %v200 = vshrl.u32 %v199, 7
    %v201 = vsub.s32 %v198, %v200
    %v202 = vrot.slane %v44, %v201
    %v203 = vcombine.high %v202, %v202
    %206 = vmatprep.subr.mxu0 %v46
    %207 = vmatpush1.msra.mxu0 %v45
    %208 = vmatprep.subr.mxu0 %v50
    %209 = vmatpush1.msra.mxu0 %v49
    %210 = vmatprep.subr.mxu0 %v54
    %211 = vmatpush1.msra.mxu0 %v53
    %212 = vmatprep.subr.mxu0 %v58
    %213 = vmatpush1.msra.mxu0 %v57
    %214 = vmatprep.subr.mxu0 %v62
    %215 = vmatpush1.msra.mxu0 %v61
    %216 = vmatprep.subr.mxu0 %v66
    %217 = vmatpush1.msra.mxu0 %v65
    %218 = vmatprep.subr.mxu0 %v70
    %219 = vmatpush1.msra.mxu0 %v69
    %220 = vmatprep.subr.mxu0 %v74
    %221 = vmatpush1.msra.mxu0 %v73
    %222 = vmatprep.subr.mxu0 %v78
    %223 = vmatpush1.msra.mxu0 %v77
    %224 = vmatprep.subr.mxu0 %v82
    %225 = vmatpush1.msra.mxu0 %v81
    %226 = vmatprep.subr.mxu0 %v86
    %227 = vmatpush1.msra.mxu0 %v85
    %228 = vmatprep.subr.mxu0 %v90
    %229 = vmatpush1.msra.mxu0 %v89
    %230 = vmatprep.subr.mxu0 %v94
    %231 = vmatpush1.msra.mxu0 %v93
    %232 = vmatprep.subr.mxu0 %v98
    %233 = vmatpush1.msra.mxu0 %v97
    %234 = vmatprep.subr.mxu0 %v102
    %235 = vmatpush1.msra.mxu0 %v101
    %236 = vmatprep.subr.mxu0 %v106
    %237 = vmatpush1.msra.mxu0 %v105
    %238 = vmatprep.subr.mxu0 %v110
    %239 = vmatpush1.msra.mxu0 %v109
    %240 = vmatprep.subr.mxu0 %v114
    %241 = vmatpush1.msra.mxu0 %v113
    %242 = vmatprep.subr.mxu0 %v118
    %243 = vmatpush1.msra.mxu0 %v117
    %244 = vmatprep.subr.mxu0 %v122
    %245 = vmatpush1.msra.mxu0 %v121
    %246 = vmatprep.subr.mxu0 %v126
    %247 = vmatpush1.msra.mxu0 %v125
    %248 = vmatprep.subr.mxu0 %v130
    %249 = vmatpush1.msra.mxu0 %v129
    %250 = vmatprep.subr.mxu0 %v134
    %251 = vmatpush1.msra.mxu0 %v133
    %252 = vmatprep.subr.mxu0 %v138
    %253 = vmatpush1.msra.mxu0 %v137
    %254 = vmatprep.subr.mxu0 %v142
    %255 = vmatpush1.msra.mxu0 %v141
    %256 = vmatprep.subr.mxu0 %v146
    %257 = vmatpush1.msra.mxu0 %v145
    %258 = vmatprep.subr.mxu0 %v150
    %259 = vmatpush1.msra.mxu0 %v149
    %260 = vmatprep.subr.mxu0 %v154
    %261 = vmatpush1.msra.mxu0 %v153
    %262 = vmatprep.subr.mxu0 %v158
    %263 = vmatpush1.msra.mxu0 %v157
    %264 = vmatprep.subr.mxu0 %v162
    %265 = vmatpush1.msra.mxu0 %v161
    %266 = vmatprep.subr.mxu0 %v166
    %267 = vmatpush1.msra.mxu0 %v165
    %268 = vmatprep.subr.mxu0 %v170
    %269 = vmatpush1.msra.mxu0 %v169
    %270 = vmatprep.mubr.f32.mxu0 %v203
    %271 = vmatmul.mubr.f32.gmra.mrb[0].mxu0 %v202
    %v272 = vpop.f32.mrb[0].mxu0
    %v273 = vadd.f32 %v178, %v272
    %v274 = vpop.f32.mrb[0].mxu0
    %v275 = vadd.f32 %v182, %v274
    %276 = vdwg.mxu0
    %277 = vmatprep.subr.mxu0 %v48
    %278 = vmatpush1.msra.mxu0 %v47
    %279 = vmatprep.subr.mxu0 %v52
    %280 = vmatpush1.msra.mxu0 %v51
    %281 = vmatprep.subr.mxu0 %v56
    %282 = vmatpush1.msra.mxu0 %v55
    %283 = vmatprep.subr.mxu0 %v60
    %284 = vmatpush1.msra.mxu0 %v59
    %285 = vmatprep.subr.mxu0 %v64
    %286 = vmatpush1.msra.mxu0 %v63
    %287 = vmatprep.subr.mxu0 %v68
    %288 = vmatpush1.msra.mxu0 %v67
    %289 = vmatprep.subr.mxu0 %v72
    %290 = vmatpush1.msra.mxu0 %v71
    %291 = vmatprep.subr.mxu0 %v76
    %292 = vmatpush1.msra.mxu0 %v75
    %293 = vmatprep.subr.mxu0 %v80
    %294 = vmatpush1.msra.mxu0 %v79
    %295 = vmatprep.subr.mxu0 %v84
    %296 = vmatpush1.msra.mxu0 %v83
    %297 = vmatprep.subr.mxu0 %v88
    %298 = vmatpush1.msra.mxu0 %v87
    %299 = vmatprep.subr.mxu0 %v92
    %300 = vmatpush1.msra.mxu0 %v91
    %301 = vmatprep.subr.mxu0 %v96
    %302 = vmatpush1.msra.mxu0 %v95
    %303 = vmatprep.subr.mxu0 %v100
    %304 = vmatpush1.msra.mxu0 %v99
    %305 = vmatprep.subr.mxu0 %v104
    %306 = vmatpush1.msra.mxu0 %v103
    %307 = vmatprep.subr.mxu0 %v108
    %308 = vmatpush1.msra.mxu0 %v107
    %309 = vmatprep.subr.mxu0 %v112
    %310 = vmatpush1.msra.mxu0 %v111
    %311 = vmatprep.subr.mxu0 %v116
    %312 = vmatpush1.msra.mxu0 %v115
    %313 = vmatprep.subr.mxu0 %v120
    %314 = vmatpush1.msra.mxu0 %v119
    %315 = vmatprep.subr.mxu0 %v124
    %316 = vmatpush1.msra.mxu0 %v123
    %317 = vmatprep.subr.mxu0 %v128
    %318 = vmatpush1.msra.mxu0 %v127
    %319 = vmatprep.subr.mxu0 %v132
    %320 = vmatpush1.msra.mxu0 %v131
    %321 = vmatprep.subr.mxu0 %v136
    %322 = vmatpush1.msra.mxu0 %v135
    %323 = vmatprep.subr.mxu0 %v140
    %324 = vmatpush1.msra.mxu0 %v139
    %325 = vmatprep.subr.mxu0 %v144
    %326 = vmatpush1.msra.mxu0 %v143
    %327 = vmatprep.subr.mxu0 %v148
    %328 = vmatpush1.msra.mxu0 %v147
    %329 = vmatprep.subr.mxu0 %v152
    %330 = vmatpush1.msra.mxu0 %v151
    %331 = vmatprep.subr.mxu0 %v156
    %332 = vmatpush1.msra.mxu0 %v155
    %333 = vmatprep.subr.mxu0 %v160
    %334 = vmatpush1.msra.mxu0 %v159
    %335 = vmatprep.subr.mxu0 %v164
    %336 = vmatpush1.msra.mxu0 %v163
    %337 = vmatprep.subr.mxu0 %v168
    %338 = vmatpush1.msra.mxu0 %v167
    %339 = vmatprep.subr.mxu0 %v172
    %340 = vmatpush1.msra.mxu0 %v171
    %341 = vmatprep.mubr.f32.mxu0 %v203
    %342 = vmatmul.mubr.f32.gmra.mrb[0].mxu0 %v202
    %v343 = vpop.f32.mrb[0].mxu0
    %v344 = vadd.f32 %v186, %v343
    %v345 = vpop.f32.mrb[0].mxu0
    %v346 = vadd.f32 %v190, %v345
    %347 = vdwg.mxu0
    %v348 = vmax.f32 %v273, 0.0
    %v349 = vmax.f32 %v275, 0.0
    %v350 = vmax.f32 %v344, 0.0
    %v351 = vmax.f32 %v346, 0.0
    %v352 = vld [vmem:[%s3] sm:$0xff]
    %v353 = vld [vmem:[%s3 + $0x8] sm:$0xff]
    %v354 = vld [vmem:[%s3 + $0x10] sm:$0xff]
    %v355 = vld [vmem:[%s3 + $0x18] sm:$0xff]
    %v356 = vld [vmem:[%s3 + $0x20] sm:$0xff]
    %v357 = vld [vmem:[%s3 + $0x28] sm:$0xff]
    %v358 = vld [vmem:[%s3 + $0x30] sm:$0xff]
    %v359 = vld [vmem:[%s3 + $0x38] sm:$0xff]
    %v360 = vld [vmem:[%s3 + $0x40] sm:$0xff]
    %v361 = vld [vmem:[%s3 + $0x48] sm:$0xff]
    %v362 = vld [vmem:[%s3 + $0x50] sm:$0xff]
    %v363 = vld [vmem:[%s3 + $0x58] sm:$0xff]
    %v364 = vld [vmem:[%s3 + $0x60] sm:$0xff]
    %v365 = vld [vmem:[%s3 + $0x68] sm:$0xff]
    %v366 = vld [vmem:[%s3 + $0x70] sm:$0xff]
    %v367 = vld [vmem:[%s3 + $0x78] sm:$0xff]
    %v368 = vld [vmem:[%s3 + $0x80] sm:$0xff]
    %v369 = vld [vmem:[%s3 + $0x88] sm:$0xff]
    %v370 = vld [vmem:[%s3 + $0x90] sm:$0xff]
    %v371 = vld [vmem:[%s3 + $0x98] sm:$0xff]
    %v372 = vld [vmem:[%s3 + $0xa0] sm:$0xff]
    %v373 = vld [vmem:[%s3 + $0xa8] sm:$0xff]
    %v374 = vld [vmem:[%s3 + $0xb0] sm:$0xff]
    %v375 = vld [vmem:[%s3 + $0xb8] sm:$0xff]
    %v376 = vld [vmem:[%s3 + $0xc0] sm:$0xff]
    %v377 = vld [vmem:[%s3 + $0xc8] sm:$0xff]
    %v378 = vld [vmem:[%s3 + $0xd0] sm:$0xff]
    %v379 = vld [vmem:[%s3 + $0xd8] sm:$0xff]
    %v380 = vld [vmem:[%s3 + $0xe0] sm:$0xff]
    %v381 = vld [vmem:[%s3 + $0xe8] sm:$0xff]
    %v382 = vld [vmem:[%s3 + $0xf0] sm:$0xff]
    %v383 = vld [vmem:[%s3 + $0xf8] sm:$0xff]
    %v384 = vld [vmem:[%s4] sm:$0x1]
    %v386 = vlaneseq
    %v387 = vshrl.u32 %v386, 7
    %v388 = vsub.s32 0, %v387
    %v389 = vrot.slane %v384, %v388
    %391 = vmatprep.subr.mxu0 0.0
    %392 = vmatpush1.msra.mxu0 %v352
    %393 = vmatprep.subr.mxu0 0.0
    %394 = vmatpush1.msra.mxu0 %v353
    %395 = vmatprep.subr.mxu0 0.0
    %396 = vmatpush1.msra.mxu0 %v354
    %397 = vmatprep.subr.mxu0 0.0
    %398 = vmatpush1.msra.mxu0 %v355
    %399 = vmatprep.subr.mxu0 0.0
    %400 = vmatpush1.msra.mxu0 %v356
    %401 = vmatprep.subr.mxu0 0.0
    %402 = vmatpush1.msra.mxu0 %v357
    %403 = vmatprep.subr.mxu0 0.0
    %404 = vmatpush1.msra.mxu0 %v358
    %405 = vmatprep.subr.mxu0 0.0
    %406 = vmatpush1.msra.mxu0 %v359
    %407 = vmatprep.subr.mxu0 0.0
    %408 = vmatpush1.msra.mxu0 %v360
    %409 = vmatprep.subr.mxu0 0.0
    %410 = vmatpush1.msra.mxu0 %v361
    %411 = vmatprep.subr.mxu0 0.0
    %412 = vmatpush1.msra.mxu0 %v362
    %413 = vmatprep.subr.mxu0 0.0
    %414 = vmatpush1.msra.mxu0 %v363
    %415 = vmatprep.subr.mxu0 0.0
    %416 = vmatpush1.msra.mxu0 %v364
    %417 = vmatprep.subr.mxu0 0.0
    %418 = vmatpush1.msra.mxu0 %v365
    %419 = vmatprep.subr.mxu0 0.0
    %420 = vmatpush1.msra.mxu0 %v366
    %421 = vmatprep.subr.mxu0 0.0
    %422 = vmatpush1.msra.mxu0 %v367
    %423 = vmatprep.subr.mxu0 0.0
    %424 = vmatpush1.msra.mxu0 %v368
    %425 = vmatprep.subr.mxu0 0.0
    %426 = vmatpush1.msra.mxu0 %v369
    %427 = vmatprep.subr.mxu0 0.0
    %428 = vmatpush1.msra.mxu0 %v370
    %429 = vmatprep.subr.mxu0 0.0
    %430 = vmatpush1.msra.mxu0 %v371
    %431 = vmatprep.subr.mxu0 0.0
    %432 = vmatpush1.msra.mxu0 %v372
    %433 = vmatprep.subr.mxu0 0.0
    %434 = vmatpush1.msra.mxu0 %v373
    %435 = vmatprep.subr.mxu0 0.0
    %436 = vmatpush1.msra.mxu0 %v374
    %437 = vmatprep.subr.mxu0 0.0
    %438 = vmatpush1.msra.mxu0 %v375
    %439 = vmatprep.subr.mxu0 0.0
    %440 = vmatpush1.msra.mxu0 %v376
    %441 = vmatprep.subr.mxu0 0.0
    %442 = vmatpush1.msra.mxu0 %v377
    %443 = vmatprep.subr.mxu0 0.0
    %444 = vmatpush1.msra.mxu0 %v378
    %445 = vmatprep.subr.mxu0 0.0
    %446 = vmatpush1.msra.mxu0 %v379
    %447 = vmatprep.subr.mxu0 0.0
    %448 = vmatpush1.msra.mxu0 %v380
    %449 = vmatprep.subr.mxu0 0.0
    %450 = vmatpush1.msra.mxu0 %v381
    %451 = vmatprep.subr.mxu0 0.0
    %452 = vmatpush1.msra.mxu0 %v382
    %453 = vmatprep.subr.mxu0 0.0
    %454 = vmatpush1.msra.mxu0 %v383
    %455 = vmatprep.mubr.f32.mxu0 %v349
    %456 = vmatmul.mubr.f32.gmra.mrb[0].mxu0 %v348
    %v457 = vpop.f32.mrb[0].mxu0
    %v458 = vadd.f32 %v389, %v457
    %v459 = vpop.f32.mrb[0].mxu0
    %460 = vdwg.mxu0
    %vm461 = vcmask 123904
    %462 = vst.msk [vmem:[#allocation5] sm:$0x3] %vm461, %v458
    %v463 = vld [vmem:[%s5] sm:$0xff]
    %v464 = vld [vmem:[%s5 + $0x8] sm:$0xff]
    %v465 = vld [vmem:[%s5 + $0x10] sm:$0xff]
    %v466 = vld [vmem:[%s5 + $0x18] sm:$0xff]
    %v467 = vld [vmem:[%s5 + $0x20] sm:$0xff]
    %v468 = vld [vmem:[%s5 + $0x28] sm:$0xff]
    %v469 = vld [vmem:[%s5 + $0x30] sm:$0xff]
    %v470 = vld [vmem:[%s5 + $0x38] sm:$0xff]
    %v471 = vld [vmem:[%s5 + $0x40] sm:$0xff]
    %v472 = vld [vmem:[%s5 + $0x48] sm:$0xff]
    %v473 = vld [vmem:[%s5 + $0x50] sm:$0xff]
    %v474 = vld [vmem:[%s5 + $0x58] sm:$0xff]
    %v475 = vld [vmem:[%s5 + $0x60] sm:$0xff]
    %v476 = vld [vmem:[%s5 + $0x68] sm:$0xff]
    %v477 = vld [vmem:[%s5 + $0x70] sm:$0xff]
    %v478 = vld [vmem:[%s5 + $0x78] sm:$0xff]
    %v479 = vld [vmem:[%s5 + $0x80] sm:$0xff]
    %v480 = vld [vmem:[%s5 + $0x88] sm:$0xff]
    %v481 = vld [vmem:[%s5 + $0x90] sm:$0xff]
    %v482 = vld [vmem:[%s5 + $0x98] sm:$0xff]
    %v483 = vld [vmem:[%s5 + $0xa0] sm:$0xff]
    %v484 = vld [vmem:[%s5 + $0xa8] sm:$0xff]
    %v485 = vld [vmem:[%s5 + $0xb0] sm:$0xff]
    %v486 = vld [vmem:[%s5 + $0xb8] sm:$0xff]
    %v487 = vld [vmem:[%s5 + $0xc0] sm:$0xff]
    %v488 = vld [vmem:[%s5 + $0xc8] sm:$0xff]
    %v489 = vld [vmem:[%s5 + $0xd0] sm:$0xff]
    %v490 = vld [vmem:[%s5 + $0xd8] sm:$0xff]
    %v491 = vld [vmem:[%s5 + $0xe0] sm:$0xff]
    %v492 = vld [vmem:[%s5 + $0xe8] sm:$0xff]
    %v493 = vld [vmem:[%s5 + $0xf0] sm:$0xff]
    %v494 = vld [vmem:[%s5 + $0xf8] sm:$0xff]
    %v495 = vld [vmem:[%s6] sm:$0x1]
    %v497 = vlaneseq
    %v498 = vshrl.u32 %v497, 7
    %v499 = vsub.s32 0, %v498
    %v500 = vrot.slane %v495, %v499
    %502 = vmatprep.subr.mxu0 0.0
    %503 = vmatpush1.msra.mxu0 %v463
    %504 = vmatprep.subr.mxu0 0.0
    %505 = vmatpush1.msra.mxu0 %v464
    %506 = vmatprep.subr.mxu0 0.0
    %507 = vmatpush1.msra.mxu0 %v465
    %508 = vmatprep.subr.mxu0 0.0
    %509 = vmatpush1.msra.mxu0 %v466
    %510 = vmatprep.subr.mxu0 0.0
    %511 = vmatpush1.msra.mxu0 %v467
    %512 = vmatprep.subr.mxu0 0.0
    %513 = vmatpush1.msra.mxu0 %v468
    %514 = vmatprep.subr.mxu0 0.0
    %515 = vmatpush1.msra.mxu0 %v469
    %516 = vmatprep.subr.mxu0 0.0
    %517 = vmatpush1.msra.mxu0 %v470
    %518 = vmatprep.subr.mxu0 0.0
    %519 = vmatpush1.msra.mxu0 %v471
    %520 = vmatprep.subr.mxu0 0.0
    %521 = vmatpush1.msra.mxu0 %v472
    %522 = vmatprep.subr.mxu0 0.0
    %523 = vmatpush1.msra.mxu0 %v473
    %524 = vmatprep.subr.mxu0 0.0
    %525 = vmatpush1.msra.mxu0 %v474
    %526 = vmatprep.subr.mxu0 0.0
    %527 = vmatpush1.msra.mxu0 %v475
    %528 = vmatprep.subr.mxu0 0.0
    %529 = vmatpush1.msra.mxu0 %v476
    %530 = vmatprep.subr.mxu0 0.0
    %531 = vmatpush1.msra.mxu0 %v477
    %532 = vmatprep.subr.mxu0 0.0
    %533 = vmatpush1.msra.mxu0 %v478
    %534 = vmatprep.subr.mxu0 0.0
    %535 = vmatpush1.msra.mxu0 %v479
    %536 = vmatprep.subr.mxu0 0.0
    %537 = vmatpush1.msra.mxu0 %v480
    %538 = vmatprep.subr.mxu0 0.0
    %539 = vmatpush1.msra.mxu0 %v481
    %540 = vmatprep.subr.mxu0 0.0
    %541 = vmatpush1.msra.mxu0 %v482
    %542 = vmatprep.subr.mxu0 0.0
    %543 = vmatpush1.msra.mxu0 %v483
    %544 = vmatprep.subr.mxu0 0.0
    %545 = vmatpush1.msra.mxu0 %v484
    %546 = vmatprep.subr.mxu0 0.0
    %547 = vmatpush1.msra.mxu0 %v485
    %548 = vmatprep.subr.mxu0 0.0
    %549 = vmatpush1.msra.mxu0 %v486
    %550 = vmatprep.subr.mxu0 0.0
    %551 = vmatpush1.msra.mxu0 %v487
    %552 = vmatprep.subr.mxu0 0.0
    %553 = vmatpush1.msra.mxu0 %v488
    %554 = vmatprep.subr.mxu0 0.0
    %555 = vmatpush1.msra.mxu0 %v489
    %556 = vmatprep.subr.mxu0 0.0
    %557 = vmatpush1.msra.mxu0 %v490
    %558 = vmatprep.subr.mxu0 0.0
    %559 = vmatpush1.msra.mxu0 %v491
    %560 = vmatprep.subr.mxu0 0.0
    %561 = vmatpush1.msra.mxu0 %v492
    %562 = vmatprep.subr.mxu0 0.0
    %563 = vmatpush1.msra.mxu0 %v493
    %564 = vmatprep.subr.mxu0 0.0
    %565 = vmatpush1.msra.mxu0 %v494
    %566 = vmatprep.mubr.f32.mxu0 %v351
    %567 = vmatmul.mubr.f32.gmra.mrb[0].mxu0 %v350
    %v568 = vpop.f32.mrb[0].mxu0
    %v569 = vadd.f32 %v500, %v568
    %v570 = vpop.f32.mrb[0].mxu0
    %571 = vdwg.mxu0
    %572 = vst.msk [vmem:[#allocation6] sm:$0x3] %vm461, %v569
    // Predicated region
    $region34: #{tpu_custom_call.1} parent=1 // pred_check
      _
    $region35: #{tpu_custom_call.1} parent=1 // pred_check_branch
      %574 = sbr.rel (0) target = $region37
    $region36: #{tpu_custom_call.1} parent=1 // pred_region
      %s576 = ssub.s32 32, 32
      %577 = vsyncadd [#allocation4], %s576
      %s579 = sshll.u32 [#allocation5], 4
      %s580 = int_to_ptr.vmem [resolvable:$true] %s579
      %582 = dma.vmem_to_hbm [thread:$0]  %s580, 32, %s7, [#allocation4]
    $region37: #{tpu_custom_call.1} parent=1 // pred_fallthru
      _
    // Predicated region
    $region38: #{tpu_custom_call.1} parent=1 // pred_check
      _
    $region39: #{tpu_custom_call.1} parent=1 // pred_check_branch
      %584 = sbr.rel (0) target = $region41
    $region40: #{tpu_custom_call.1} parent=1 // pred_region
      %s586 = ssub.s32 32, 32
      %587 = vsyncadd [#allocation7], %s586
      %s589 = sshll.u32 [#allocation6], 4
      %s590 = int_to_ptr.vmem [resolvable:$true] %s589
      %592 = dma.vmem_to_hbm [thread:$0]  %s590, 32, %s8, [#allocation7]
    $region41: #{tpu_custom_call.1} parent=1 // pred_fallthru
      _
    // Predicated region
    $region42: #{tpu_custom_call.1} parent=1 // pred_check
      _
    $region43: #{tpu_custom_call.1} parent=1 // pred_check_branch
      %594 = sbr.rel (0) target = $region45
    $region44: #{tpu_custom_call.1} parent=1 // pred_region
      %595 = dma.done [#allocation4], 32
    $region45: #{tpu_custom_call.1} parent=1 // pred_fallthru
      _
    // Predicated region
    $region46: #{tpu_custom_call.1} parent=1 // pred_check
      _
    $region47: #{tpu_custom_call.1} parent=1 // pred_check_branch
      %597 = sbr.rel (0) target = $region49
    $region48: #{tpu_custom_call.1} parent=1 // pred_region
      %598 = dma.done [#allocation7], 32
    $region49: #{tpu_custom_call.1} parent=1 // pred_fallthru
      _
    %599 = vsyncpa [#allocation3], 1
    %600 = vsyncpa [#allocation4], 1
    %601 = vsyncpa [#allocation7], 1

</llo_original>
